<compile_context>
chip_gen: v6e
topology: v6e:2x2x1
jax: 0.10.0
libtpu: 0.0.40
codegen_flags: <defaults>
</compile_context>

<pallas_src>
import math

import jax
import jax.numpy as jnp
from jax.experimental import pallas as pl
from jax.experimental.pallas import tpu as pltpu

EPS = 1e-5


# ----------------------------------------------------------------------------
# small helpers
# ----------------------------------------------------------------------------
def _round_up(v, m):
    return (v + m - 1) // m * m


def _pad2(a, rows, cols):
    return jnp.pad(a, ((0, rows - a.shape[0]), (0, cols - a.shape[1])))


def _row(v):
    return v.reshape(1, -1).astype(jnp.float32)


def _physical_vmem_bytes():
    try:
        info = pltpu.get_tpu_info()
        v = getattr(info, "vmem_capacity_bytes", None)
        if v:
            return int(v)
    except Exception:
        pass
    return 64 << 20  # conservative default (v7x per-TensorCore VMEM)


def _clamp_vmem(est_bytes):
    phys = _physical_vmem_bytes()
    return int(min(max(est_bytes, 16 << 20), int(0.7 * phys)))


def _auto_batch_tile():
    # v7x: 64 MiB VMEM per TensorCore -> smaller batch tiles; v5e/v6e: 128 MiB.
    return 512 if _physical_vmem_bytes() <= (64 << 20) else 1024


def _row_mask(i, tile, n_real):
    """(1, tile) f32 mask of real (non-padded) batch rows for grid step i."""
    if n_real % tile == 0:          # batch is an exact multiple of the tile
        return jnp.ones((1, tile), jnp.float32)
    rows = i * tile + jax.lax.broadcasted_iota(jnp.int32, (1, tile), 1)
    return (rows < n_real).astype(jnp.float32)


# ----------------------------------------------------------------------------
# Path A: single fused kernel (small batches, one pallas_call, no grid)
# ----------------------------------------------------------------------------
def _make_fused_kernel(n_real, n_pad, compute_dtype):
    inv_n = 1.0 / float(n_real)

    def layer(h_in, w_ref, g_row, be_row, mask_row):
        y = jnp.dot(h_in, w_ref[...], preferred_element_type=jnp.float32)
        # Two independent M=1 stats matmuls (no serial mean -> center -> var chain).
        s = jnp.dot(mask_row, y, preferred_element_type=jnp.float32)
        q = jnp.dot(mask_row, y * y, preferred_element_type=jnp.float32)
        mean = s * inv_n
        var = jnp.maximum(q * inv_n - mean * mean, 0.0)
        scale = g_row * jax.lax.rsqrt(var + EPS)
        shift = be_row - mean * scale
        # BN as y*scale + shift: one fewer full-tensor VPU pass than centering.
        # Padded rows become relu(shift); they are masked out of the stats above.
        h = jnp.maximum(y * scale + shift, 0.0)
        return h.astype(compute_dtype)          # bf16 activations between layers

    def kernel(x_ref,
               w1_ref, g1_ref, be1_ref,
               w2_ref, g2_ref, be2_ref,
               w3_ref, g3_ref, be3_ref,
               wc_ref, bc_ref,
               out_ref):
        if n_pad == n_real:
            mask_row = jnp.ones((1, n_pad), jnp.float32)
        else:
            mask_row = (jax.lax.broadcasted_iota(jnp.int32, (1, n_pad), 1)
                        < n_real).astype(jnp.float32)
        h = layer(x_ref[...], w1_ref, g1_ref[...], be1_ref[...], mask_row)
        h = layer(h, w2_ref, g2_ref[...], be2_ref[...], mask_row)
        h = layer(h, w3_ref, g3_ref[...], be3_ref[...], mask_row)
        out = jnp.dot(h, wc_ref[...], preferred_element_type=jnp.float32) + bc_ref[...]
        out_ref[...] = out.astype(out_ref.dtype)

    return kernel


# ----------------------------------------------------------------------------
# Path B: batch-gridded two-pass-BN pipeline (one pallas_call per layer)
# ----------------------------------------------------------------------------
def _make_linear_stats_kernel(n_real, tile, compute_dtype):
    """y = x @ W ; accumulate per-feature [sum; sum_of_squares] over real rows."""
    def kernel(x_ref, w_ref, y_ref, stat_ref):
        i = pl.program_id(0)

        @pl.when(i == 0)
        def _():
            stat_ref[...] = jnp.zeros_like(stat_ref)

        y = jnp.dot(x_ref[...], w_ref[...], preferred_element_type=jnp.float32)
        mask = _row_mask(i, tile, n_real)
        s = jnp.dot(mask, y, preferred_element_type=jnp.float32)
        q = jnp.dot(mask, y * y, preferred_element_type=jnp.float32)
        stat_ref[...] += jnp.concatenate([s, q], axis=0)
        y_ref[...] = y.astype(y_ref.dtype)

    return kernel


def _make_bn_linear_stats_kernel(n_real, tile, compute_dtype):
    """h = relu(y*scale + shift); y_next = h @ W ; accumulate stats of y_next."""
    def kernel(y_ref, sc_ref, sh_ref, w_ref, yn_ref, stat_ref):
        i = pl.program_id(0)

        @pl.when(i == 0)
        def _():
            stat_ref[...] = jnp.zeros_like(stat_ref)

        h = jnp.maximum(y_ref[...].astype(jnp.float32) * sc_ref[...] + sh_ref[...], 0.0)
        yn = jnp.dot(h.astype(compute_dtype), w_ref[...],
                     preferred_element_type=jnp.float32)
        # Padded rows are relu(shift) != 0 here -> must stay masked out of stats.
        mask = _row_mask(i, tile, n_real)
        s = jnp.dot(mask, yn, preferred_element_type=jnp.float32)
        q = jnp.dot(mask, yn * yn, preferred_element_type=jnp.float32)
        stat_ref[...] += jnp.concatenate([s, q], axis=0)
        yn_ref[...] = yn.astype(yn_ref.dtype)

    return kernel


def _make_bn_classifier_kernel(compute_dtype):
    """h = relu(y*scale + shift); out = h @ Wc + bc.  No accumulator -> 'parallel'."""
    def kernel(y_ref, sc_ref, sh_ref, w_ref, b_ref, out_ref):
        h = jnp.maximum(y_ref[...].astype(jnp.float32) * sc_ref[...] + sh_ref[...], 0.0)
        out = jnp.dot(h.astype(compute_dtype), w_ref[...],
                      preferred_element_type=jnp.float32) + b_ref[...]
        out_ref[...] = out.astype(out_ref.dtype)

    return kernel


def _bn_scale_shift(stats, gamma_row, beta_row, n_real):
    """Fold batch stats into a per-feature scale/shift (tiny host-side JAX ops)."""
    inv_n = 1.0 / float(n_real)
    mean = stats[0:1, :] * inv_n
    # var = E[y^2] - mean^2; clamp tiny negative values from cancellation.
    var = jnp.maximum(stats[1:2, :] * inv_n - mean * mean, 0.0)
    scale = gamma_row * jax.lax.rsqrt(var + EPS)
    shift = beta_row - mean * scale
    return scale, shift


# ----------------------------------------------------------------------------
# wrapper
# ----------------------------------------------------------------------------
def dnn_forward(x, params, compute_dtype=jnp.bfloat16, batch_tile=None):
    """x: (N, input_dim) f32.  params: PyTorch-layout dict (see init_params).

    Returns (N, num_cls) in compute_dtype.
    """
    n, din = x.shape
    num_cls = params["wc"].shape[0]
    f32 = jnp.float32
    f3p = 128                                   # layer-3 width 64 -> 128 (lane dense)
    cpad = _round_up(max(num_cls, 128), 128)    # lane-dense classifier output
    cd = jnp.dtype(compute_dtype).itemsize

    # Host-side layout prep: weights transposed to (in, out); only lane (N/F)
    # dims padded -- x's feature dim stays unpadded (full-array last dim is a
    # legal block), so the dominant HBM read carries no padding bytes.
    w1 = params["w1"].T.astype(compute_dtype)                               # (din, 256)
    w2 = params["w2"].T.astype(compute_dtype)                               # (256, 128)
    w3 = _pad2(params["w3"].T.astype(f32), 128, f3p).astype(compute_dtype)  # (128, 128)
    wc = _pad2(params["wc"].T.astype(f32), f3p, cpad).astype(compute_dtype)  # (128, cpad)
    bc = _pad2(_row(params["bc"]), 1, cpad)

    g1, be1 = _row(params["g1"]), _row(params["be1"])
    g2, be2 = _row(params["g2"]), _row(params["be2"])
    g3 = _pad2(_row(params["g3"]), 1, f3p)      # padded gammas 0 -> padded feats stay 0
    be3 = _pad2(_row(params["be3"]), 1, f3p)

    tile = batch_tile if batch_tile is not None else _auto_batch_tile()
    assert tile % 8 == 0, "batch_tile must be a multiple of 8 (128 recommended)"
    use_grid = (batch_tile is not None) or (n > tile)

    # ------------------------------------------------------------------ small
    if not use_grid:
        n_pad = _round_up(max(n, 16), 16)       # 16: bf16 sublane packing
        xp = jnp.pad(x.astype(f32), ((0, n_pad - n), (0, 0))).astype(compute_dtype)
        args = (xp, w1, g1, be1, w2, g2, be2, w3, g3, be3, wc, bc)

        in_bytes = sum(int(a.size) * a.dtype.itemsize for a in args)
        est = n_pad * (din + 4 * 256 + 4 * 128 + cpad) * 4 + 4 * in_bytes + (4 << 20)

        vmem_spec = pl.BlockSpec(memory_space=pltpu.MemorySpace.VMEM)
        out = pl.pallas_call(
            _make_fused_kernel(n, n_pad, compute_dtype),
            out_shape=jax.ShapeDtypeStruct((n_pad, cpad), compute_dtype),
            in_specs=[vmem_spec] * len(args),
            out_specs=vmem_spec,
            compiler_params=pltpu.CompilerParams(vmem_limit_bytes=_clamp_vmem(est)),
        )(*args)
        return out[:n, :num_cls]

    # ---------------------------------------------------------------- gridded
    n_pad = _round_up(n, tile)
    grid = (n_pad // tile,)
    xp = jnp.pad(x.astype(f32), ((0, n_pad - n), (0, 0))).astype(compute_dtype)

    per_iter = (tile * (max(din, 256) + 256) * cd * 2      # double-buffered I/O tiles
                + tile * 256 * 4 * 3                       # f32 intermediates
                + (din + 3 * 256) * 256 * cd               # resident weights (overcount)
                + (2 << 20))
    vlim = _clamp_vmem(per_iter)
    arb = pltpu.CompilerParams(dimension_semantics=("arbitrary",),
                               vmem_limit_bytes=vlim)
    par = pltpu.CompilerParams(dimension_semantics=("parallel",),
                               vmem_limit_bytes=vlim)

    def tiled(fdim):
        return pl.BlockSpec((tile, fdim), lambda i: (i, 0))

    def resident(shape):
        return pl.BlockSpec(shape, lambda i: (0, 0))

    # layer 1: linear + batch stats (stats accumulator -> 'arbitrary' axis)
    y, stats = pl.pallas_call(
        _make_linear_stats_kernel(n, tile, compute_dtype),
        grid=grid,
        out_shape=(jax.ShapeDtypeStruct((n_pad, 256), compute_dtype),
                   jax.ShapeDtypeStruct((2, 256), jnp.float32)),
        in_specs=[tiled(din), resident((din, 256))],
        out_specs=(tiled(256), resident((2, 256))),
        compiler_params=arb,
    )(xp, w1)

    # layers 2 and 3: BN+ReLU of the previous pre-activation, next linear + stats
    layer_w = (w2, w3)
    layer_g = (g1, g2)
    layer_be = (be1, be2)
    widths_in = (256, 128)
    widths_out = (128, f3p)
    for li in range(2):
        scale, shift = _bn_scale_shift(stats, layer_g[li], layer_be[li], n)
        fin, fout = widths_in[li], widths_out[li]
        y, stats = pl.pallas_call(
            _make_bn_linear_stats_kernel(n, tile, compute_dtype),
            grid=grid,
            out_shape=(jax.ShapeDtypeStruct((n_pad, fout), compute_dtype),
                       jax.ShapeDtypeStruct((2, fout), jnp.float32)),
            in_specs=[tiled(fin), resident((1, fin)), resident((1, fin)),
                      resident((fin, fout))],
            out_specs=(tiled(fout), resident((2, fout))),
            compiler_params=arb,
        )(y, scale, shift, layer_w[li])

    # final: BN+ReLU then classifier -- no accumulator, megacore-parallel batch axis
    scale, shift = _bn_scale_shift(stats, g3, be3, n)
    out = pl.pallas_call(
        _make_bn_classifier_kernel(compute_dtype),
        grid=grid,
        out_shape=jax.ShapeDtypeStruct((n_pad, cpad), compute_dtype),
        in_specs=[tiled(f3p), resident((1, f3p)), resident((1, f3p)),
                  resident((f3p, cpad)), resident((1, cpad))],
        out_specs=tiled(cpad),
        compiler_params=par,
    )(y, scale, shift, wc, bc)

    return out[:n, :num_cls]


# ----------------------------------------------------------------------------
# init + pure-JAX reference
# ----------------------------------------------------------------------------
def init_params(key, input_dim, num_cls):
    """Matches the module's __init__: kaiming_normal_ hidden weights, zero linear
    biases, BN gamma=1/beta=0, classifier weight=ones / bias=zeros (PyTorch layout)."""
    k1, k2, k3 = jax.random.split(key, 3)

    def kaiming(k, out_f, in_f):
        return jax.random.normal(k, (out_f, in_f), jnp.float32) * math.sqrt(2.0 / in_f)

    return {
        "w1": kaiming(k1, 256, input_dim), "b1": jnp.zeros(256, jnp.float32),
        "g1": jnp.ones(256, jnp.float32), "be1": jnp.zeros(256, jnp.float32),
        "w2": kaiming(k2, 128, 256), "b2": jnp.zeros(128, jnp.float32),
        "g2": jnp.ones(128, jnp.float32), "be2": jnp.zeros(128, jnp.float32),
        "w3": kaiming(k3, 64, 128), "b3": jnp.zeros(64, jnp.float32),
        "g3": jnp.ones(64, jnp.float32), "be3": jnp.zeros(64, jnp.float32),
        "wc": jnp.ones((num_cls, 64), jnp.float32), "bc": jnp.zeros(num_cls, jnp.float32),
    }


def dnn_reference(x, p):
    """Pure-JAX f32 reference of the PyTorch forward (training-mode BN)."""
    def block(h, w, b, g, be):
        h = h @ w.T + b
        m = jnp.mean(h, axis=0, keepdims=True)
        v = jnp.mean((h - m) ** 2, axis=0, keepdims=True)
        return jnp.maximum((h - m) / jnp.sqrt(v + EPS) * g + be, 0.0)

    h = block(x, p["w1"], p["b1"], p["g1"], p["be1"])
    h = block(h, p["w2"], p["b2"], p["g2"], p["be2"])
    h = block(h, p["w3"], p["b3"], p["g3"], p["be3"])
    return h @ p["wc"].T + p["bc"]


# ----------------------------------------------------------------------------
# self-test
# ----------------------------------------------------------------------------
if __name__ == "__main__":
    key = jax.random.PRNGKey(0)
    kx1, kx2, kp = jax.random.split(key, 3)

    input_dim, num_cls = 32, 10
    params = init_params(kp, input_dim, num_cls)

    # ---- small batch: single fused kernel (one pallas_call) ----
    x_small = jax.random.normal(kx1, (8, input_dim), jnp.float32)
    ref_s = dnn_reference(x_small, params)

    out = jax.block_until_ready(dnn_forward(x_small, params, compute_dtype=jnp.float32))
    assert out.shape == (8, num_cls)
    assert jnp.allclose(out, ref_s, atol=1e-4, rtol=1e-4), "fused f32 path mismatch"

    out = jax.block_until_ready(dnn_forward(x_small, params))
    assert out.shape == (8, num_cls)
    assert jnp.allclose(out.astype(jnp.float32), ref_s, atol=2e-1, rtol=5e-2), \
        "fused bf16 path mismatch"

    # ---- modest batch with forced tiling: batch-gridded two-pass-BN pipeline ----
    x_big = jax.random.normal(kx2, (240, input_dim), jnp.float32)
    ref_b = dnn_reference(x_big, params)

    out = jax.block_until_ready(
        dnn_forward(x_big, params, compute_dtype=jnp.float32, batch_tile=128))
    assert out.shape == (240, num_cls)
    assert jnp.allclose(out, ref_b, atol=1e-4, rtol=1e-4), "gridded f32 path mismatch"

    out = jax.block_until_ready(dnn_forward(x_big, params, batch_tile=128))
    assert out.shape == (240, num_cls)
    assert jnp.allclose(out.astype(jnp.float32), ref_b, atol=2e-1, rtol=5e-2), \
        "gridded bf16 path mismatch"

    print("KERNEL_OK")
</pallas_src>

<mosaic_0001>
module attributes {stable_mosaic.version = 11 : i64} {
  func.func @kernel(%arg0: memref<16x32xf32, #tpu.memory_space<vmem>>, %arg1: memref<32x256xf32, #tpu.memory_space<vmem>>, %arg2: memref<1x256xf32, #tpu.memory_space<vmem>>, %arg3: memref<1x256xf32, #tpu.memory_space<vmem>>, %arg4: memref<256x128xf32, #tpu.memory_space<vmem>>, %arg5: memref<1x128xf32, #tpu.memory_space<vmem>>, %arg6: memref<1x128xf32, #tpu.memory_space<vmem>>, %arg7: memref<128x128xf32, #tpu.memory_space<vmem>>, %arg8: memref<1x128xf32, #tpu.memory_space<vmem>>, %arg9: memref<1x128xf32, #tpu.memory_space<vmem>>, %arg10: memref<128x128xf32, #tpu.memory_space<vmem>>, %arg11: memref<1x128xf32, #tpu.memory_space<vmem>>, %arg12: memref<16x128xf32, #tpu.memory_space<vmem>>) attributes {dimension_semantics = [], scalar_prefetch = 0 : i64, scratch_operands = 0 : i64, tpu.core_type = #tpu.core_type<tc>} {
    %0 = tpu.iota {dimensions = array<i32: 1>} : vector<1x16xi32>
    %c8_i32 = arith.constant 8 : i32
    %1 = vector.broadcast %c8_i32 : i32 to vector<1x16xi32>
    %2 = arith.cmpi slt, %0, %1 : vector<1x16xi32>
    %3 = arith.extui %2 : vector<1x16xi1> to vector<1x16xi32>
    %4 = arith.sitofp %3 : vector<1x16xi32> to vector<1x16xf32>
    %c0 = arith.constant 0 : index
    %c0_0 = arith.constant 0 : index
    %5 = vector.load %arg0[%c0, %c0_0] : memref<16x32xf32, #tpu.memory_space<vmem>>, vector<16x32xf32>
    %c0_1 = arith.constant 0 : index
    %c0_2 = arith.constant 0 : index
    %6 = vector.load %arg2[%c0_1, %c0_2] : memref<1x256xf32, #tpu.memory_space<vmem>>, vector<1x256xf32>
    %c0_3 = arith.constant 0 : index
    %c0_4 = arith.constant 0 : index
    %7 = vector.load %arg3[%c0_3, %c0_4] : memref<1x256xf32, #tpu.memory_space<vmem>>, vector<1x256xf32>
    %c0_5 = arith.constant 0 : index
    %c0_6 = arith.constant 0 : index
    %8 = vector.load %arg1[%c0_5, %c0_6] : memref<32x256xf32, #tpu.memory_space<vmem>>, vector<32x256xf32>
    %cst = arith.constant dense<0.000000e+00> : vector<16x256xf32>
    %9 = tpu.matmul %5, %8, %cst {dimension_numbers = #tpu.dot_dimension_numbers<[1], [0], [0], [1], [0, 0, 1, 1], [], []>} : vector<16x32xf32>, vector<32x256xf32>, vector<16x256xf32> -> vector<16x256xf32>
    %cst_7 = arith.constant dense<0.000000e+00> : vector<1x256xf32>
    %10 = tpu.matmul %4, %9, %cst_7 {dimension_numbers = #tpu.dot_dimension_numbers<[1], [0], [0], [1], [0, 0, 1, 1], [], []>} : vector<1x16xf32>, vector<16x256xf32>, vector<1x256xf32> -> vector<1x256xf32>
    %11 = arith.mulf %9, %9 : vector<16x256xf32>
    %cst_8 = arith.constant dense<0.000000e+00> : vector<1x256xf32>
    %12 = tpu.matmul %4, %11, %cst_8 {dimension_numbers = #tpu.dot_dimension_numbers<[1], [0], [0], [1], [0, 0, 1, 1], [], []>} : vector<1x16xf32>, vector<16x256xf32>, vector<1x256xf32> -> vector<1x256xf32>
    %cst_9 = arith.constant 1.250000e-01 : f32
    %13 = vector.broadcast %cst_9 : f32 to vector<1x256xf32>
    %14 = arith.mulf %10, %13 : vector<1x256xf32>
    %cst_10 = arith.constant 1.250000e-01 : f32
    %15 = vector.broadcast %cst_10 : f32 to vector<1x256xf32>
    %16 = arith.mulf %12, %15 : vector<1x256xf32>
    %17 = arith.mulf %14, %14 : vector<1x256xf32>
    %18 = arith.subf %16, %17 : vector<1x256xf32>
    %cst_11 = arith.constant 0.000000e+00 : f32
    %19 = vector.broadcast %cst_11 : f32 to vector<1x256xf32>
    %20 = arith.maximumf %18, %19 : vector<1x256xf32>
    %cst_12 = arith.constant 9.99999974E-6 : f32
    %21 = vector.broadcast %cst_12 : f32 to vector<1x256xf32>
    %22 = arith.addf %20, %21 : vector<1x256xf32>
    %23 = math.rsqrt %22 : vector<1x256xf32>
    %24 = arith.mulf %6, %23 : vector<1x256xf32>
    %25 = arith.mulf %14, %24 : vector<1x256xf32>
    %26 = arith.subf %7, %25 : vector<1x256xf32>
    %27 = vector.broadcast %24 : vector<1x256xf32> to vector<16x256xf32>
    %28 = arith.mulf %9, %27 : vector<16x256xf32>
    %29 = vector.broadcast %26 : vector<1x256xf32> to vector<16x256xf32>
    %30 = arith.addf %28, %29 : vector<16x256xf32>
    %cst_13 = arith.constant 0.000000e+00 : f32
    %31 = vector.broadcast %cst_13 : f32 to vector<16x256xf32>
    %32 = arith.maximumf %30, %31 : vector<16x256xf32>
    %c0_14 = arith.constant 0 : index
    %c0_15 = arith.constant 0 : index
    %33 = vector.load %arg5[%c0_14, %c0_15] : memref<1x128xf32, #tpu.memory_space<vmem>>, vector<1x128xf32>
    %c0_16 = arith.constant 0 : index
    %c0_17 = arith.constant 0 : index
    %34 = vector.load %arg6[%c0_16, %c0_17] : memref<1x128xf32, #tpu.memory_space<vmem>>, vector<1x128xf32>
    %c0_18 = arith.constant 0 : index
    %c0_19 = arith.constant 0 : index
    %35 = vector.load %arg4[%c0_18, %c0_19] : memref<256x128xf32, #tpu.memory_space<vmem>>, vector<256x128xf32>
    %cst_20 = arith.constant dense<0.000000e+00> : vector<16x128xf32>
    %36 = tpu.matmul %32, %35, %cst_20 {dimension_numbers = #tpu.dot_dimension_numbers<[1], [0], [0], [1], [0, 0, 1, 1], [], []>} : vector<16x256xf32>, vector<256x128xf32>, vector<16x128xf32> -> vector<16x128xf32>
    %cst_21 = arith.constant dense<0.000000e+00> : vector<1x128xf32>
    %37 = tpu.matmul %4, %36, %cst_21 {dimension_numbers = #tpu.dot_dimension_numbers<[1], [0], [0], [1], [0, 0, 1, 1], [], []>} : vector<1x16xf32>, vector<16x128xf32>, vector<1x128xf32> -> vector<1x128xf32>
    %38 = arith.mulf %36, %36 : vector<16x128xf32>
    %cst_22 = arith.constant dense<0.000000e+00> : vector<1x128xf32>
    %39 = tpu.matmul %4, %38, %cst_22 {dimension_numbers = #tpu.dot_dimension_numbers<[1], [0], [0], [1], [0, 0, 1, 1], [], []>} : vector<1x16xf32>, vector<16x128xf32>, vector<1x128xf32> -> vector<1x128xf32>
    %cst_23 = arith.constant 1.250000e-01 : f32
    %40 = vector.broadcast %cst_23 : f32 to vector<1x128xf32>
    %41 = arith.mulf %37, %40 : vector<1x128xf32>
    %cst_24 = arith.constant 1.250000e-01 : f32
    %42 = vector.broadcast %cst_24 : f32 to vector<1x128xf32>
    %43 = arith.mulf %39, %42 : vector<1x128xf32>
    %44 = arith.mulf %41, %41 : vector<1x128xf32>
    %45 = arith.subf %43, %44 : vector<1x128xf32>
    %cst_25 = arith.constant 0.000000e+00 : f32
    %46 = vector.broadcast %cst_25 : f32 to vector<1x128xf32>
    %47 = arith.maximumf %45, %46 : vector<1x128xf32>
    %cst_26 = arith.constant 9.99999974E-6 : f32
    %48 = vector.broadcast %cst_26 : f32 to vector<1x128xf32>
    %49 = arith.addf %47, %48 : vector<1x128xf32>
    %50 = math.rsqrt %49 : vector<1x128xf32>
    %51 = arith.mulf %33, %50 : vector<1x128xf32>
    %52 = arith.mulf %41, %51 : vector<1x128xf32>
    %53 = arith.subf %34, %52 : vector<1x128xf32>
    %54 = vector.broadcast %51 : vector<1x128xf32> to vector<16x128xf32>
    %55 = arith.mulf %36, %54 : vector<16x128xf32>
    %56 = vector.broadcast %53 : vector<1x128xf32> to vector<16x128xf32>
    %57 = arith.addf %55, %56 : vector<16x128xf32>
    %cst_27 = arith.constant 0.000000e+00 : f32
    %58 = vector.broadcast %cst_27 : f32 to vector<16x128xf32>
    %59 = arith.maximumf %57, %58 : vector<16x128xf32>
    %c0_28 = arith.constant 0 : index
    %c0_29 = arith.constant 0 : index
    %60 = vector.load %arg8[%c0_28, %c0_29] : memref<1x128xf32, #tpu.memory_space<vmem>>, vector<1x128xf32>
    %c0_30 = arith.constant 0 : index
    %c0_31 = arith.constant 0 : index
    %61 = vector.load %arg9[%c0_30, %c0_31] : memref<1x128xf32, #tpu.memory_space<vmem>>, vector<1x128xf32>
    %c0_32 = arith.constant 0 : index
    %c0_33 = arith.constant 0 : index
    %62 = vector.load %arg7[%c0_32, %c0_33] : memref<128x128xf32, #tpu.memory_space<vmem>>, vector<128x128xf32>
    %cst_34 = arith.constant dense<0.000000e+00> : vector<16x128xf32>
    %63 = tpu.matmul %59, %62, %cst_34 {dimension_numbers = #tpu.dot_dimension_numbers<[1], [0], [0], [1], [0, 0, 1, 1], [], []>} : vector<16x128xf32>, vector<128x128xf32>, vector<16x128xf32> -> vector<16x128xf32>
    %cst_35 = arith.constant dense<0.000000e+00> : vector<1x128xf32>
    %64 = tpu.matmul %4, %63, %cst_35 {dimension_numbers = #tpu.dot_dimension_numbers<[1], [0], [0], [1], [0, 0, 1, 1], [], []>} : vector<1x16xf32>, vector<16x128xf32>, vector<1x128xf32> -> vector<1x128xf32>
    %65 = arith.mulf %63, %63 : vector<16x128xf32>
    %cst_36 = arith.constant dense<0.000000e+00> : vector<1x128xf32>
    %66 = tpu.matmul %4, %65, %cst_36 {dimension_numbers = #tpu.dot_dimension_numbers<[1], [0], [0], [1], [0, 0, 1, 1], [], []>} : vector<1x16xf32>, vector<16x128xf32>, vector<1x128xf32> -> vector<1x128xf32>
    %cst_37 = arith.constant 1.250000e-01 : f32
    %67 = vector.broadcast %cst_37 : f32 to vector<1x128xf32>
    %68 = arith.mulf %64, %67 : vector<1x128xf32>
    %cst_38 = arith.constant 1.250000e-01 : f32
    %69 = vector.broadcast %cst_38 : f32 to vector<1x128xf32>
    %70 = arith.mulf %66, %69 : vector<1x128xf32>
    %71 = arith.mulf %68, %68 : vector<1x128xf32>
    %72 = arith.subf %70, %71 : vector<1x128xf32>
    %cst_39 = arith.constant 0.000000e+00 : f32
    %73 = vector.broadcast %cst_39 : f32 to vector<1x128xf32>
    %74 = arith.maximumf %72, %73 : vector<1x128xf32>
    %cst_40 = arith.constant 9.99999974E-6 : f32
    %75 = vector.broadcast %cst_40 : f32 to vector<1x128xf32>
    %76 = arith.addf %74, %75 : vector<1x128xf32>
    %77 = math.rsqrt %76 : vector<1x128xf32>
    %78 = arith.mulf %60, %77 : vector<1x128xf32>
    %79 = arith.mulf %68, %78 : vector<1x128xf32>
    %80 = arith.subf %61, %79 : vector<1x128xf32>
    %81 = vector.broadcast %78 : vector<1x128xf32> to vector<16x128xf32>
    %82 = arith.mulf %63, %81 : vector<16x128xf32>
    %83 = vector.broadcast %80 : vector<1x128xf32> to vector<16x128xf32>
    %84 = arith.addf %82, %83 : vector<16x128xf32>
    %cst_41 = arith.constant 0.000000e+00 : f32
    %85 = vector.broadcast %cst_41 : f32 to vector<16x128xf32>
    %86 = arith.maximumf %84, %85 : vector<16x128xf32>
    %c0_42 = arith.constant 0 : index
    %c0_43 = arith.constant 0 : index
    %87 = vector.load %arg10[%c0_42, %c0_43] : memref<128x128xf32, #tpu.memory_space<vmem>>, vector<128x128xf32>
    %cst_44 = arith.constant dense<0.000000e+00> : vector<16x128xf32>
    %88 = tpu.matmul %86, %87, %cst_44 {dimension_numbers = #tpu.dot_dimension_numbers<[1], [0], [0], [1], [0, 0, 1, 1], [], []>} : vector<16x128xf32>, vector<128x128xf32>, vector<16x128xf32> -> vector<16x128xf32>
    %c0_45 = arith.constant 0 : index
    %c0_46 = arith.constant 0 : index
    %89 = vector.load %arg11[%c0_45, %c0_46] : memref<1x128xf32, #tpu.memory_space<vmem>>, vector<1x128xf32>
    %90 = vector.broadcast %89 : vector<1x128xf32> to vector<16x128xf32>
    %91 = arith.addf %88, %90 : vector<16x128xf32>
    %c0_47 = arith.constant 0 : index
    %c0_48 = arith.constant 0 : index
    %92 = vector.load %arg12[%c0_47, %c0_48] : memref<16x128xf32, #tpu.memory_space<vmem>>, vector<16x128xf32>
    tpu.vector_store %arg12[%c0_47, %c0_48], %91 {strides = array<i32>} : memref<16x128xf32, #tpu.memory_space<vmem>>, vector<16x128xf32>,
    return
  }
}

</mosaic_0001>

<llo_original>
// kernel: tpu_custom_call.1
$region0: #{tpu_custom_call.1}
  #allocation0 [shape = 'u32[]', space=smem, size = 0x4, offset = 0x4, fixed_abs, tag = 'smem constant byte address 0x4 - core index']
  #allocation1 [shape = 'u32[144,128]{1,0:T(1,128)}', space=vmem, size = 0x12000, scoped, tag = 'internal scratch']
  %s0 = inlined_call_operand.hbm [shape: f32[16,32], index: 0, kind: input, shape index: {}]
  %s1 = inlined_call_operand.hbm [shape: f32[32,256], index: 1, kind: input, shape index: {}]
  %s2 = inlined_call_operand.vmem [shape: f32[1,256], index: 2, kind: input, shape index: {}]
  %s3 = inlined_call_operand.vmem [shape: f32[1,256], index: 3, kind: input, shape index: {}]
  %s4 = inlined_call_operand.hbm [shape: f32[256,128], index: 4, kind: input, shape index: {}]
  %s5 = inlined_call_operand.vmem [shape: f32[1,128], index: 5, kind: input, shape index: {}]
  %s6 = inlined_call_operand.vmem [shape: f32[1,128], index: 6, kind: input, shape index: {}]
  %s7 = inlined_call_operand.hbm [shape: f32[128,128], index: 7, kind: input, shape index: {}]
  %s8 = inlined_call_operand.vmem [shape: f32[1,128], index: 8, kind: input, shape index: {}]
  %s9 = inlined_call_operand.vmem [shape: f32[1,128], index: 9, kind: input, shape index: {}]
  %s10 = inlined_call_operand.hbm [shape: f32[128,128], index: 10, kind: input, shape index: {}]
  %s11 = inlined_call_operand.vmem [shape: f32[1,128], index: 11, kind: input, shape index: {}]
  %s12 = inlined_call_operand.hbm [shape: f32[16,128], index: 12, kind: output, shape index: {}]
  %s13 = sld [smem:[#allocation0]]
  $region78: #{tpu_custom_call.1} parent=0
    _
  %s15 = ssub.s32 1, %s13
  %s16 = scalar_select 0, %s15, %s13
  $region1: #{tpu_custom_call.1} parent=0
    #allocation2 [shape = 'u8[8192]{0}', space=vmem, size = 0x2000, scoped, tag = 'input window, operand 0, single buffered']
    #allocation3 [shape = 's32[1]{0}', space=sflag, size = 0x4, scoped, tag = 'scoped memory for tpu_custom_call.1']
    #allocation4 [shape = 's32[1]{0}', space=sflag, size = 0x4, scoped, tag = 'scoped memory for tpu_custom_call.1']
    #allocation5 [shape = 'u8[32768]{0}', space=vmem, size = 0x8000, scoped, tag = 'input window, operand 1, single buffered']
    #allocation6 [shape = 's32[1]{0}', space=sflag, size = 0x4, scoped, tag = 'scoped memory for tpu_custom_call.1']
    #allocation7 [shape = 'u8[131072]{0}', space=vmem, size = 0x20000, scoped, tag = 'input window, operand 4, single buffered']
    #allocation8 [shape = 'u8[65536]{0}', space=vmem, size = 0x10000, scoped, tag = 'input window, operand 7, single buffered']
    #allocation9 [shape = 's32[1]{0}', space=sflag, size = 0x4, scoped, tag = 'scoped memory for tpu_custom_call.1']
    #allocation10 [shape = 'u8[65536]{0}', space=vmem, size = 0x10000, scoped, tag = 'input window, operand 10, single buffered']
    #allocation11 [shape = 'u8[8192]{0}', space=vmem, size = 0x2000, scoped, tag = 'output window, operand 0, single buffered']
    %17 = vsyncpa [#allocation3], 0
    %18 = vsyncpa [#allocation6], 0
    %19 = vsyncpa [#allocation9], 0
    %20 = vsyncpa [#allocation4], 0
    // Predicated region
    $region2: #{tpu_custom_call.1} parent=1 // pred_check
      _
    $region3: #{tpu_custom_call.1} parent=1 // pred_check_branch
      %22 = sbr.rel (0) target = $region5
    $region4: #{tpu_custom_call.1} parent=1 // pred_region
      %s24 = ssub.s32 256, 256
      %25 = vsyncadd [#allocation3], %s24
      %s26 = sshll.u32 [#allocation2], 4
      %s27 = int_to_ptr.vmem [resolvable:$true] %s26
      %32 = dma.hbm_to_vmem [thread:$0]  %s0, 256, %s27, [#allocation3], 128, 128, 8
    $region5: #{tpu_custom_call.1} parent=1 // pred_fallthru
      _
    // Predicated region
    $region6: #{tpu_custom_call.1} parent=1 // pred_check
      _
    $region7: #{tpu_custom_call.1} parent=1 // pred_check_branch
      %34 = sbr.rel (0) target = $region9
    $region8: #{tpu_custom_call.1} parent=1 // pred_region
      %s36 = ssub.s32 1024, 1024
      %37 = vsyncadd [#allocation6], %s36
      %s38 = sshll.u32 [#allocation5], 4
      %s39 = int_to_ptr.vmem [resolvable:$true] %s38
      %44 = dma.hbm_to_vmem [thread:$0]  %s1, 1024, %s39, [#allocation6], 256, 256, 16
    $region9: #{tpu_custom_call.1} parent=1 // pred_fallthru
      _
    // Predicated region
    $region10: #{tpu_custom_call.1} parent=1 // pred_check
      _
    $region11: #{tpu_custom_call.1} parent=1 // pred_check_branch
      %46 = sbr.rel (0) target = $region13
    $region12: #{tpu_custom_call.1} parent=1 // pred_region
      _
    $region13: #{tpu_custom_call.1} parent=1 // pred_fallthru
      _
    // Predicated region
    $region14: #{tpu_custom_call.1} parent=1 // pred_check
      _
    $region15: #{tpu_custom_call.1} parent=1 // pred_check_branch
      %48 = sbr.rel (0) target = $region17
    $region16: #{tpu_custom_call.1} parent=1 // pred_region
      _
    $region17: #{tpu_custom_call.1} parent=1 // pred_fallthru
      _
    // Predicated region
    $region18: #{tpu_custom_call.1} parent=1 // pred_check
      _
    $region19: #{tpu_custom_call.1} parent=1 // pred_check_branch
      %50 = sbr.rel (0) target = $region21
    $region20: #{tpu_custom_call.1} parent=1 // pred_region
      %s52 = ssub.s32 4096, 4096
      %53 = vsyncadd [#allocation6], %s52
      %s54 = sshll.u32 [#allocation7], 4
      %s55 = int_to_ptr.vmem [resolvable:$true] %s54
      %60 = dma.hbm_to_vmem [thread:$0]  %s4, 4096, %s55, [#allocation6], 128, 128, 8
    $region21: #{tpu_custom_call.1} parent=1 // pred_fallthru
      _
    // Predicated region
    $region22: #{tpu_custom_call.1} parent=1 // pred_check
      _
    $region23: #{tpu_custom_call.1} parent=1 // pred_check_branch
      %62 = sbr.rel (0) target = $region25
    $region24: #{tpu_custom_call.1} parent=1 // pred_region
      _
    $region25: #{tpu_custom_call.1} parent=1 // pred_fallthru
      _
    // Predicated region
    $region26: #{tpu_custom_call.1} parent=1 // pred_check
      _
    $region27: #{tpu_custom_call.1} parent=1 // pred_check_branch
      %64 = sbr.rel (0) target = $region29
    $region28: #{tpu_custom_call.1} parent=1 // pred_region
      _
    $region29: #{tpu_custom_call.1} parent=1 // pred_fallthru
      _
    // Predicated region
    $region30: #{tpu_custom_call.1} parent=1 // pred_check
      _
    $region31: #{tpu_custom_call.1} parent=1 // pred_check_branch
      %66 = sbr.rel (0) target = $region33
    $region32: #{tpu_custom_call.1} parent=1 // pred_region
      %s68 = ssub.s32 2048, 2048
      %69 = vsyncadd [#allocation9], %s68
      %s70 = sshll.u32 [#allocation8], 4
      %s71 = int_to_ptr.vmem [resolvable:$true] %s70
      %76 = dma.hbm_to_vmem [thread:$0]  %s7, 2048, %s71, [#allocation9], 128, 128, 8
    $region33: #{tpu_custom_call.1} parent=1 // pred_fallthru
      _
    // Predicated region
    $region34: #{tpu_custom_call.1} parent=1 // pred_check
      _
    $region35: #{tpu_custom_call.1} parent=1 // pred_check_branch
      %78 = sbr.rel (0) target = $region37
    $region36: #{tpu_custom_call.1} parent=1 // pred_region
      _
    $region37: #{tpu_custom_call.1} parent=1 // pred_fallthru
      _
    // Predicated region
    $region38: #{tpu_custom_call.1} parent=1 // pred_check
      _
    $region39: #{tpu_custom_call.1} parent=1 // pred_check_branch
      %80 = sbr.rel (0) target = $region41
    $region40: #{tpu_custom_call.1} parent=1 // pred_region
      _
    $region41: #{tpu_custom_call.1} parent=1 // pred_fallthru
      _
    // Predicated region
    $region42: #{tpu_custom_call.1} parent=1 // pred_check
      _
    $region43: #{tpu_custom_call.1} parent=1 // pred_check_branch
      %82 = sbr.rel (0) target = $region45
    $region44: #{tpu_custom_call.1} parent=1 // pred_region
      %s84 = ssub.s32 2048, 2048
      %85 = vsyncadd [#allocation9], %s84
      %s86 = sshll.u32 [#allocation10], 4
      %s87 = int_to_ptr.vmem [resolvable:$true] %s86
      %92 = dma.hbm_to_vmem [thread:$0]  %s10, 2048, %s87, [#allocation9], 128, 128, 8
    $region45: #{tpu_custom_call.1} parent=1 // pred_fallthru
      _
    // Predicated region
    $region46: #{tpu_custom_call.1} parent=1 // pred_check
      _
    $region47: #{tpu_custom_call.1} parent=1 // pred_check_branch
      %94 = sbr.rel (0) target = $region49
    $region48: #{tpu_custom_call.1} parent=1 // pred_region
      _
    $region49: #{tpu_custom_call.1} parent=1 // pred_fallthru
      _
    // Predicated region
    $region50: #{tpu_custom_call.1} parent=1 // pred_check
      _
    $region51: #{tpu_custom_call.1} parent=1 // pred_check_branch
      %96 = sbr.rel (0) target = $region53
    $region52: #{tpu_custom_call.1} parent=1 // pred_region
      %97 = dma.done [#allocation3], 256
    $region53: #{tpu_custom_call.1} parent=1 // pred_fallthru
      _
    // Predicated region
    $region54: #{tpu_custom_call.1} parent=1 // pred_check
      _
    $region55: #{tpu_custom_call.1} parent=1 // pred_check_branch
      %99 = sbr.rel (0) target = $region57
    $region56: #{tpu_custom_call.1} parent=1 // pred_region
      %100 = dma.done [#allocation6], 1024
    $region57: #{tpu_custom_call.1} parent=1 // pred_fallthru
      _
    // Predicated region
    $region58: #{tpu_custom_call.1} parent=1 // pred_check
      _
    $region59: #{tpu_custom_call.1} parent=1 // pred_check_branch
      %102 = sbr.rel (0) target = $region61
    $region60: #{tpu_custom_call.1} parent=1 // pred_region
      %103 = dma.done [#allocation6], 4096
    $region61: #{tpu_custom_call.1} parent=1 // pred_fallthru
      _
    // Predicated region
    $region62: #{tpu_custom_call.1} parent=1 // pred_check
      _
    $region63: #{tpu_custom_call.1} parent=1 // pred_check_branch
      %105 = sbr.rel (0) target = $region65
    $region64: #{tpu_custom_call.1} parent=1 // pred_region
      %106 = dma.done [#allocation9], 2048
    $region65: #{tpu_custom_call.1} parent=1 // pred_fallthru
      _
    // Predicated region
    $region66: #{tpu_custom_call.1} parent=1 // pred_check
      _
    $region67: #{tpu_custom_call.1} parent=1 // pred_check_branch
      %108 = sbr.rel (0) target = $region69
    $region68: #{tpu_custom_call.1} parent=1 // pred_region
      %109 = dma.done [#allocation9], 2048
    $region69: #{tpu_custom_call.1} parent=1 // pred_fallthru
      _
    %v110 = vlaneseq
    %v111 = vand.u32 %v110, 127
    %vm112 = vcmp.lt.s32.totalorder %v111, 8
    %v113 = vsel %vm112, 1, 0
    %v114 = vcvt.s32.f32 %v113
    %v115 = vld [vmem:[#allocation2] sm:$0xff]
    %v116 = vld [vmem:[#allocation2 + $0x8] sm:$0xff]
    %v117 = vld [vmem:[%s2] sm:$0x3]
    %v118 = vld [vmem:[%s3] sm:$0x3]
    %v119 = vld [vmem:[#allocation5] sm:$0xff]
    %v120 = vld [vmem:[#allocation5 + $0x8] sm:$0xff]
    %v121 = vld [vmem:[#allocation5 + $0x10] sm:$0xff]
    %v122 = vld [vmem:[#allocation5 + $0x18] sm:$0xff]
    %v123 = vld [vmem:[#allocation5 + $0x20] sm:$0xff]
    %v124 = vld [vmem:[#allocation5 + $0x28] sm:$0xff]
    %v125 = vld [vmem:[#allocation5 + $0x30] sm:$0xff]
    %v126 = vld [vmem:[#allocation5 + $0x38] sm:$0xff]
    %vm127 = vcmask 261120
    %v129 = vsel %vm127, %v115, 0
    %v132 = vsel %vm127, %v116, 0
    %134 = vmatprep.subr.mxu0 0.0
    %135 = vmatpush1.msra.mxu0 0.0
    %136 = vmatprep.subr.mxu0 0.0
    %137 = vmatpush1.msra.mxu0 0.0
    %138 = vmatprep.subr.mxu0 0.0
    %139 = vmatpush1.msra.mxu0 0.0
    %140 = vmatprep.subr.mxu0 0.0
    %141 = vmatpush1.msra.mxu0 0.0
    %142 = vmatprep.subr.mxu0 0.0
    %143 = vmatpush1.msra.mxu0 0.0
    %144 = vmatprep.subr.mxu0 0.0
    %145 = vmatpush1.msra.mxu0 0.0
    %146 = vmatprep.subr.mxu0 0.0
    %147 = vmatpush1.msra.mxu0 0.0
    %148 = vmatprep.subr.mxu0 0.0
    %149 = vmatpush1.msra.mxu0 0.0
    %150 = vmatprep.subr.mxu0 0.0
    %151 = vmatpush1.msra.mxu0 0.0
    %152 = vmatprep.subr.mxu0 0.0
    %153 = vmatpush1.msra.mxu0 0.0
    %154 = vmatprep.subr.mxu0 0.0
    %155 = vmatpush1.msra.mxu0 0.0
    %156 = vmatprep.subr.mxu0 0.0
    %157 = vmatpush1.msra.mxu0 0.0
    %158 = vmatprep.subr.mxu0 %v126
    %159 = vmatpush1.msra.mxu0 %v125
    %160 = vmatprep.subr.mxu0 %v124
    %161 = vmatpush1.msra.mxu0 %v123
    %162 = vmatprep.subr.mxu0 %v122
    %163 = vmatpush1.msra.mxu0 %v121
    %164 = vmatprep.subr.mxu0 %v120
    %165 = vmatpush1.msra.mxu0 %v119
    %166 = vmatprep.subr.mxu0 0.0
    %167 = vmatpush2.msra.mxu0 0.0
    %168 = vmatprep.subr.mxu0 0.0
    %169 = vmatpush2.msra.mxu0 0.0
    %170 = vmatprep.subr.mxu0 0.0
    %171 = vmatpush2.msra.mxu0 0.0
    %172 = vmatprep.subr.mxu0 0.0
    %173 = vmatpush2.msra.mxu0 0.0
    %174 = vmatprep.subr.mxu0 0.0
    %175 = vmatpush2.msra.mxu0 0.0
    %176 = vmatprep.subr.mxu0 0.0
    %177 = vmatpush2.msra.mxu0 0.0
    %178 = vmatprep.subr.mxu0 0.0
    %179 = vmatpush2.msra.mxu0 0.0
    %180 = vmatprep.subr.mxu0 0.0
    %181 = vmatpush2.msra.mxu0 0.0
    %182 = vmatprep.subr.mxu0 0.0
    %183 = vmatpush2.msra.mxu0 0.0
    %184 = vmatprep.subr.mxu0 0.0
    %185 = vmatpush2.msra.mxu0 0.0
    %186 = vmatprep.subr.mxu0 0.0
    %187 = vmatpush2.msra.mxu0 0.0
    %188 = vmatprep.subr.mxu0 0.0
    %189 = vmatpush2.msra.mxu0 0.0
    %190 = vmatprep.subr.mxu0 0.0
    %191 = vmatpush2.msra.mxu0 0.0
    %192 = vmatprep.subr.mxu0 0.0
    %193 = vmatpush2.msra.mxu0 0.0
    %194 = vmatprep.subr.mxu0 0.0
    %195 = vmatpush2.msra.mxu0 0.0
    %196 = vmatprep.subr.mxu0 0.0
    %197 = vmatpush2.msra.mxu0 0.0
    %198 = vmatprep.mubr.f32.mxu0 0.0
    %199 = vmatmul.mubr.f32.gmra.mxu0 %v129
    %v200 = vpop.f32.mrf.mxu0
    %v201 = vadd.f32 0.0, %v200
    %v202 = vpop.f32.mrf.mxu0
    %v203 = vadd.f32 0.0, %v202
    %204 = vmatprep.mubr.f32.mxu0 0.0
    %205 = vmatmul.mubr.f32.gmra.mxu0 %v132
    %v206 = vpop.f32.mrf.mxu0
    %v207 = vadd.f32 0.0, %v206
    %v208 = vpop.f32.mrf.mxu0
    %v209 = vadd.f32 0.0, %v208
    %210 = vdwg.mxu0
    %vm211 = vcmask 130048
    %v213 = vsel %vm211, %v114, 0
    %215 = vmatprep.subr.mxu0 0.0
    %216 = vmatpush1.msra.mxu0 0.0
    %217 = vmatprep.subr.mxu0 0.0
    %218 = vmatpush1.msra.mxu0 0.0
    %219 = vmatprep.subr.mxu0 0.0
    %220 = vmatpush1.msra.mxu0 0.0
    %221 = vmatprep.subr.mxu0 0.0
    %222 = vmatpush1.msra.mxu0 0.0
    %223 = vmatprep.subr.mxu0 0.0
    %224 = vmatpush1.msra.mxu0 0.0
    %225 = vmatprep.subr.mxu0 0.0
    %226 = vmatpush1.msra.mxu0 0.0
    %227 = vmatprep.subr.mxu0 0.0
    %228 = vmatpush1.msra.mxu0 0.0
    %229 = vmatprep.subr.mxu0 0.0
    %230 = vmatpush1.msra.mxu0 0.0
    %231 = vmatprep.subr.mxu0 0.0
    %232 = vmatpush1.msra.mxu0 0.0
    %233 = vmatprep.subr.mxu0 0.0
    %234 = vmatpush1.msra.mxu0 0.0
    %235 = vmatprep.subr.mxu0 0.0
    %236 = vmatpush1.msra.mxu0 0.0
    %237 = vmatprep.subr.mxu0 0.0
    %238 = vmatpush1.msra.mxu0 0.0
    %239 = vmatprep.subr.mxu0 0.0
    %240 = vmatpush1.msra.mxu0 0.0
    %241 = vmatprep.subr.mxu0 0.0
    %242 = vmatpush1.msra.mxu0 0.0
    %243 = vmatprep.subr.mxu0 %v209
    %244 = vmatpush1.msra.mxu0 %v207
    %245 = vmatprep.subr.mxu0 %v203
    %246 = vmatpush1.msra.mxu0 %v201
    %247 = vmatprep.subr.mxu0 0.0
    %248 = vmatpush2.msra.mxu0 0.0
    %249 = vmatprep.subr.mxu0 0.0
    %250 = vmatpush2.msra.mxu0 0.0
    %251 = vmatprep.subr.mxu0 0.0
    %252 = vmatpush2.msra.mxu0 0.0
    %253 = vmatprep.subr.mxu0 0.0
    %254 = vmatpush2.msra.mxu0 0.0
    %255 = vmatprep.subr.mxu0 0.0
    %256 = vmatpush2.msra.mxu0 0.0
    %257 = vmatprep.subr.mxu0 0.0
    %258 = vmatpush2.msra.mxu0 0.0
    %259 = vmatprep.subr.mxu0 0.0
    %260 = vmatpush2.msra.mxu0 0.0
    %261 = vmatprep.subr.mxu0 0.0
    %262 = vmatpush2.msra.mxu0 0.0
    %263 = vmatprep.subr.mxu0 0.0
    %264 = vmatpush2.msra.mxu0 0.0
    %265 = vmatprep.subr.mxu0 0.0
    %266 = vmatpush2.msra.mxu0 0.0
    %267 = vmatprep.subr.mxu0 0.0
    %268 = vmatpush2.msra.mxu0 0.0
    %269 = vmatprep.subr.mxu0 0.0
    %270 = vmatpush2.msra.mxu0 0.0
    %271 = vmatprep.subr.mxu0 0.0
    %272 = vmatpush2.msra.mxu0 0.0
    %273 = vmatprep.subr.mxu0 0.0
    %274 = vmatpush2.msra.mxu0 0.0
    %275 = vmatprep.subr.mxu0 0.0
    %276 = vmatpush2.msra.mxu0 0.0
    %277 = vmatprep.subr.mxu0 0.0
    %278 = vmatpush2.msra.mxu0 0.0
    %279 = vmatprep.mubr.f32.mxu0 0.0
    %280 = vmatmul.mubr.f32.gmra.mxu0 %v213
    %v281 = vpop.f32.mrf.mxu0
    %v282 = vadd.f32 0.0, %v281
    %v283 = vpop.f32.mrf.mxu0
    %v284 = vadd.f32 0.0, %v283
    %285 = vdwg.mxu0
    %v286 = vmul.f32 %v201, %v201
    %v287 = vmul.f32 %v203, %v203
    %v288 = vmul.f32 %v207, %v207
    %v289 = vmul.f32 %v209, %v209
    %290 = vmatprep.subr.mxu0 0.0
    %291 = vmatpush1.msra.mxu0 0.0
    %292 = vmatprep.subr.mxu0 0.0
    %293 = vmatpush1.msra.mxu0 0.0
    %294 = vmatprep.subr.mxu0 0.0
    %295 = vmatpush1.msra.mxu0 0.0
    %296 = vmatprep.subr.mxu0 0.0
    %297 = vmatpush1.msra.mxu0 0.0
    %298 = vmatprep.subr.mxu0 0.0
    %299 = vmatpush1.msra.mxu0 0.0
    %300 = vmatprep.subr.mxu0 0.0
    %301 = vmatpush1.msra.mxu0 0.0
    %302 = vmatprep.subr.mxu0 0.0
    %303 = vmatpush1.msra.mxu0 0.0
    %304 = vmatprep.subr.mxu0 0.0
    %305 = vmatpush1.msra.mxu0 0.0
    %306 = vmatprep.subr.mxu0 0.0
    %307 = vmatpush1.msra.mxu0 0.0
    %308 = vmatprep.subr.mxu0 0.0
    %309 = vmatpush1.msra.mxu0 0.0
    %310 = vmatprep.subr.mxu0 0.0
    %311 = vmatpush1.msra.mxu0 0.0
    %312 = vmatprep.subr.mxu0 0.0
    %313 = vmatpush1.msra.mxu0 0.0
    %314 = vmatprep.subr.mxu0 0.0
    %315 = vmatpush1.msra.mxu0 0.0
    %316 = vmatprep.subr.mxu0 0.0
    %317 = vmatpush1.msra.mxu0 0.0
    %318 = vmatprep.subr.mxu0 %v289
    %319 = vmatpush1.msra.mxu0 %v288
    %320 = vmatprep.subr.mxu0 %v287
    %321 = vmatpush1.msra.mxu0 %v286
    %322 = vmatprep.subr.mxu0 0.0
    %323 = vmatpush2.msra.mxu0 0.0
    %324 = vmatprep.subr.mxu0 0.0
    %325 = vmatpush2.msra.mxu0 0.0
    %326 = vmatprep.subr.mxu0 0.0
    %327 = vmatpush2.msra.mxu0 0.0
    %328 = vmatprep.subr.mxu0 0.0
    %329 = vmatpush2.msra.mxu0 0.0
    %330 = vmatprep.subr.mxu0 0.0
    %331 = vmatpush2.msra.mxu0 0.0
    %332 = vmatprep.subr.mxu0 0.0
    %333 = vmatpush2.msra.mxu0 0.0
    %334 = vmatprep.subr.mxu0 0.0
    %335 = vmatpush2.msra.mxu0 0.0
    %336 = vmatprep.subr.mxu0 0.0
    %337 = vmatpush2.msra.mxu0 0.0
    %338 = vmatprep.subr.mxu0 0.0
    %339 = vmatpush2.msra.mxu0 0.0
    %340 = vmatprep.subr.mxu0 0.0
    %341 = vmatpush2.msra.mxu0 0.0
    %342 = vmatprep.subr.mxu0 0.0
    %343 = vmatpush2.msra.mxu0 0.0
    %344 = vmatprep.subr.mxu0 0.0
    %345 = vmatpush2.msra.mxu0 0.0
    %346 = vmatprep.subr.mxu0 0.0
    %347 = vmatpush2.msra.mxu0 0.0
    %348 = vmatprep.subr.mxu0 0.0
    %349 = vmatpush2.msra.mxu0 0.0
    %350 = vmatprep.subr.mxu0 0.0
    %351 = vmatpush2.msra.mxu0 0.0
    %352 = vmatprep.subr.mxu0 0.0
    %353 = vmatpush2.msra.mxu0 0.0
    %354 = vmatprep.mubr.f32.mxu0 0.0
    %355 = vmatmul.mubr.f32.gmra.mxu0 %v213
    %v356 = vpop.f32.mrf.mxu0
    %v357 = vadd.f32 0.0, %v356
    %v358 = vpop.f32.mrf.mxu0
    %v359 = vadd.f32 0.0, %v358
    %360 = vdwg.mxu0
    %v361 = vmul.f32 %v282, 0.125
    %v362 = vmul.f32 %v284, 0.125
    %v363 = vmul.f32 %v357, 0.125
    %v364 = vmul.f32 %v359, 0.125
    %v365 = vmul.f32 %v361, %v361
    %v366 = vmul.f32 %v362, %v362
    %v367 = vsub.f32 %v363, %v365
    %v368 = vsub.f32 %v364, %v366
    %v369 = vmax.f32 %v367, 0.0
    %v370 = vmax.f32 %v368, 0.0
    %v371 = vadd.f32 %v369, 1e-05
    %v372 = vadd.f32 %v370, 1e-05
    %v373 = vrsqrt.pop %v371
    %v374 = vrsqrt.pop %v372
    %v377 = vcombine.low %v373, %v374
    %v379 = vunpack.c.l.s4 1966171168
    %v380 = vunpack.c.0.s8 %v379
    %v381 = vlaneseq
    %v382 = vshrl.u32 %v381, 7
    %v383 = vsub.s32 %v380, %v382
    %v384 = vrot.slane %v377, %v383
    %v386 = vunpack.c.l.s4 1966171168
    %v387 = vunpack.c.0.s8 %v386
    %v388 = vlaneseq
    %v389 = vshrl.u32 %v388, 7
    %v390 = vsub.s32 %v387, %v389
    %v391 = vrot.slane %v384, %v390
    %v393 = vmul.f32 %v117, %v391
    %v395 = vlaneseq
    %v396 = vshrl.u32 %v395, 7
    %v397 = vsub.s32 0, %v396
    %v398 = vrot.slane %v393, %v397
    %v399 = vlaneseq
    %v400 = vshrl.u32 %v399, 7
    %v401 = vsub.s32 1, %v400
    %v402 = vrot.slane %v393, %v401
    %v405 = vmul.f32 %v361, %v398
    %v406 = vmul.f32 %v362, %v402
    %v409 = vcombine.low %v405, %v406
    %v411 = vunpack.c.l.s4 1966171168
    %v412 = vunpack.c.0.s8 %v411
    %v413 = vlaneseq
    %v414 = vshrl.u32 %v413, 7
    %v415 = vsub.s32 %v412, %v414
    %v416 = vrot.slane %v409, %v415
    %v418 = vunpack.c.l.s4 1966171168
    %v419 = vunpack.c.0.s8 %v418
    %v420 = vlaneseq
    %v421 = vshrl.u32 %v420, 7
    %v422 = vsub.s32 %v419, %v421
    %v423 = vrot.slane %v416, %v422
    %v425 = vsub.f32 %v118, %v423
    %v426 = vmul.f32 %v201, %v398
    %v427 = vmul.f32 %v203, %v402
    %v428 = vmul.f32 %v207, %v398
    %v429 = vmul.f32 %v209, %v402
    %v431 = vlaneseq
    %v432 = vshrl.u32 %v431, 7
    %v433 = vsub.s32 0, %v432
    %v434 = vrot.slane %v425, %v433
    %v435 = vlaneseq
    %v436 = vshrl.u32 %v435, 7
    %v437 = vsub.s32 1, %v436
    %v438 = vrot.slane %v425, %v437
    %v441 = vadd.f32 %v426, %v434
    %v442 = vadd.f32 %v427, %v438
    %v443 = vadd.f32 %v428, %v434
    %v444 = vadd.f32 %v429, %v438
    %v445 = vmax.f32 %v441, 0.0
    %v446 = vmax.f32 %v442, 0.0
    %v447 = vmax.f32 %v443, 0.0
    %v448 = vmax.f32 %v444, 0.0
    %v449 = vld [vmem:[%s5] sm:$0x1]
    %v450 = vld [vmem:[%s6] sm:$0x1]
    %v451 = vld [vmem:[#allocation7] sm:$0xff]
    %v452 = vld [vmem:[#allocation7 + $0x8] sm:$0xff]
    %v453 = vld [vmem:[#allocation7 + $0x10] sm:$0xff]
    %v454 = vld [vmem:[#allocation7 + $0x18] sm:$0xff]
    %v455 = vld [vmem:[#allocation7 + $0x20] sm:$0xff]
    %v456 = vld [vmem:[#allocation7 + $0x28] sm:$0xff]
    %v457 = vld [vmem:[#allocation7 + $0x30] sm:$0xff]
    %v458 = vld [vmem:[#allocation7 + $0x38] sm:$0xff]
    %v459 = vld [vmem:[#allocation7 + $0x40] sm:$0xff]
    %v460 = vld [vmem:[#allocation7 + $0x48] sm:$0xff]
    %v461 = vld [vmem:[#allocation7 + $0x50] sm:$0xff]
    %v462 = vld [vmem:[#allocation7 + $0x58] sm:$0xff]
    %v463 = vld [vmem:[#allocation7 + $0x60] sm:$0xff]
    %v464 = vld [vmem:[#allocation7 + $0x68] sm:$0xff]
    %v465 = vld [vmem:[#allocation7 + $0x70] sm:$0xff]
    %v466 = vld [vmem:[#allocation7 + $0x78] sm:$0xff]
    %v467 = vld [vmem:[#allocation7 + $0x80] sm:$0xff]
    %v468 = vld [vmem:[#allocation7 + $0x88] sm:$0xff]
    %v469 = vld [vmem:[#allocation7 + $0x90] sm:$0xff]
    %v470 = vld [vmem:[#allocation7 + $0x98] sm:$0xff]
    %v471 = vld [vmem:[#allocation7 + $0xa0] sm:$0xff]
    %v472 = vld [vmem:[#allocation7 + $0xa8] sm:$0xff]
    %v473 = vld [vmem:[#allocation7 + $0xb0] sm:$0xff]
    %v474 = vld [vmem:[#allocation7 + $0xb8] sm:$0xff]
    %v475 = vld [vmem:[#allocation7 + $0xc0] sm:$0xff]
    %v476 = vld [vmem:[#allocation7 + $0xc8] sm:$0xff]
    %v477 = vld [vmem:[#allocation7 + $0xd0] sm:$0xff]
    %v478 = vld [vmem:[#allocation7 + $0xd8] sm:$0xff]
    %v479 = vld [vmem:[#allocation7 + $0xe0] sm:$0xff]
    %v480 = vld [vmem:[#allocation7 + $0xe8] sm:$0xff]
    %v481 = vld [vmem:[#allocation7 + $0xf0] sm:$0xff]
    %v482 = vld [vmem:[#allocation7 + $0xf8] sm:$0xff]
    %483 = vmatprep.subr.mxu0 0.0
    %484 = vmatpush1.msra.mxu0 %v466
    %485 = vmatprep.subr.mxu0 0.0
    %486 = vmatpush1.msra.mxu0 %v465
    %487 = vmatprep.subr.mxu0 0.0
    %488 = vmatpush1.msra.mxu0 %v464
    %489 = vmatprep.subr.mxu0 0.0
    %490 = vmatpush1.msra.mxu0 %v463
    %491 = vmatprep.subr.mxu0 0.0
    %492 = vmatpush1.msra.mxu0 %v462
    %493 = vmatprep.subr.mxu0 0.0
    %494 = vmatpush1.msra.mxu0 %v461
    %495 = vmatprep.subr.mxu0 0.0
    %496 = vmatpush1.msra.mxu0 %v460
    %497 = vmatprep.subr.mxu0 0.0
    %498 = vmatpush1.msra.mxu0 %v459
    %499 = vmatprep.subr.mxu0 0.0
    %500 = vmatpush1.msra.mxu0 %v458
    %501 = vmatprep.subr.mxu0 0.0
    %502 = vmatpush1.msra.mxu0 %v457
    %503 = vmatprep.subr.mxu0 0.0
    %504 = vmatpush1.msra.mxu0 %v456
    %505 = vmatprep.subr.mxu0 0.0
    %506 = vmatpush1.msra.mxu0 %v455
    %507 = vmatprep.subr.mxu0 0.0
    %508 = vmatpush1.msra.mxu0 %v454
    %509 = vmatprep.subr.mxu0 0.0
    %510 = vmatpush1.msra.mxu0 %v453
    %511 = vmatprep.subr.mxu0 0.0
    %512 = vmatpush1.msra.mxu0 %v452
    %513 = vmatprep.subr.mxu0 0.0
    %514 = vmatpush1.msra.mxu0 %v451
    %515 = vmatprep.subr.mxu0 0.0
    %516 = vmatpush2.msra.mxu0 %v482
    %517 = vmatprep.subr.mxu0 0.0
    %518 = vmatpush2.msra.mxu0 %v481
    %519 = vmatprep.subr.mxu0 0.0
    %520 = vmatpush2.msra.mxu0 %v480
    %521 = vmatprep.subr.mxu0 0.0
    %522 = vmatpush2.msra.mxu0 %v479
    %523 = vmatprep.subr.mxu0 0.0
    %524 = vmatpush2.msra.mxu0 %v478
    %525 = vmatprep.subr.mxu0 0.0
    %526 = vmatpush2.msra.mxu0 %v477
    %527 = vmatprep.subr.mxu0 0.0
    %528 = vmatpush2.msra.mxu0 %v476
    %529 = vmatprep.subr.mxu0 0.0
    %530 = vmatpush2.msra.mxu0 %v475
    %531 = vmatprep.subr.mxu0 0.0
    %532 = vmatpush2.msra.mxu0 %v474
    %533 = vmatprep.subr.mxu0 0.0
    %534 = vmatpush2.msra.mxu0 %v473
    %535 = vmatprep.subr.mxu0 0.0
    %536 = vmatpush2.msra.mxu0 %v472
    %537 = vmatprep.subr.mxu0 0.0
    %538 = vmatpush2.msra.mxu0 %v471
    %539 = vmatprep.subr.mxu0 0.0
    %540 = vmatpush2.msra.mxu0 %v470
    %541 = vmatprep.subr.mxu0 0.0
    %542 = vmatpush2.msra.mxu0 %v469
    %543 = vmatprep.subr.mxu0 0.0
    %544 = vmatpush2.msra.mxu0 %v468
    %545 = vmatprep.subr.mxu0 0.0
    %546 = vmatpush2.msra.mxu0 %v467
    %547 = vmatprep.mubr.f32.mxu0 %v446
    %548 = vmatmul.mubr.f32.gmra.mxu0 %v445
    %v549 = vpop.f32.mrf.mxu0
    %v550 = vadd.f32 0.0, %v549
    %v551 = vpop.f32.mrf.mxu0
    %552 = vmatprep.mubr.f32.mxu0 %v448
    %553 = vmatmul.mubr.f32.gmra.mxu0 %v447
    %v554 = vpop.f32.mrf.mxu0
    %v555 = vadd.f32 0.0, %v554
    %v556 = vpop.f32.mrf.mxu0
    %557 = vdwg.mxu0
    %558 = vmatprep.subr.mxu0 0.0
    %559 = vmatpush1.msra.mxu0 0.0
    %560 = vmatprep.subr.mxu0 0.0
    %561 = vmatpush1.msra.mxu0 0.0
    %562 = vmatprep.subr.mxu0 0.0
    %563 = vmatpush1.msra.mxu0 0.0
    %564 = vmatprep.subr.mxu0 0.0
    %565 = vmatpush1.msra.mxu0 0.0
    %566 = vmatprep.subr.mxu0 0.0
    %567 = vmatpush1.msra.mxu0 0.0
    %568 = vmatprep.subr.mxu0 0.0
    %569 = vmatpush1.msra.mxu0 0.0
    %570 = vmatprep.subr.mxu0 0.0
    %571 = vmatpush1.msra.mxu0 0.0
    %572 = vmatprep.subr.mxu0 0.0
    %573 = vmatpush1.msra.mxu0 0.0
    %574 = vmatprep.subr.mxu0 0.0
    %575 = vmatpush1.msra.mxu0 0.0
    %576 = vmatprep.subr.mxu0 0.0
    %577 = vmatpush1.msra.mxu0 0.0
    %578 = vmatprep.subr.mxu0 0.0
    %579 = vmatpush1.msra.mxu0 0.0
    %580 = vmatprep.subr.mxu0 0.0
    %581 = vmatpush1.msra.mxu0 0.0
    %582 = vmatprep.subr.mxu0 0.0
    %583 = vmatpush1.msra.mxu0 0.0
    %584 = vmatprep.subr.mxu0 0.0
    %585 = vmatpush1.msra.mxu0 0.0
    %586 = vmatprep.subr.mxu0 0.0
    %587 = vmatpush1.msra.mxu0 %v555
    %588 = vmatprep.subr.mxu0 0.0
    %589 = vmatpush1.msra.mxu0 %v550
    %590 = vmatprep.subr.mxu0 0.0
    %591 = vmatpush2.msra.mxu0 0.0
    %592 = vmatprep.subr.mxu0 0.0
    %593 = vmatpush2.msra.mxu0 0.0
    %594 = vmatprep.subr.mxu0 0.0
    %595 = vmatpush2.msra.mxu0 0.0
    %596 = vmatprep.subr.mxu0 0.0
    %597 = vmatpush2.msra.mxu0 0.0
    %598 = vmatprep.subr.mxu0 0.0
    %599 = vmatpush2.msra.mxu0 0.0
    %600 = vmatprep.subr.mxu0 0.0
    %601 = vmatpush2.msra.mxu0 0.0
    %602 = vmatprep.subr.mxu0 0.0
    %603 = vmatpush2.msra.mxu0 0.0
    %604 = vmatprep.subr.mxu0 0.0
    %605 = vmatpush2.msra.mxu0 0.0
    %606 = vmatprep.subr.mxu0 0.0
    %607 = vmatpush2.msra.mxu0 0.0
    %608 = vmatprep.subr.mxu0 0.0
    %609 = vmatpush2.msra.mxu0 0.0
    %610 = vmatprep.subr.mxu0 0.0
    %611 = vmatpush2.msra.mxu0 0.0
    %612 = vmatprep.subr.mxu0 0.0
    %613 = vmatpush2.msra.mxu0 0.0
    %614 = vmatprep.subr.mxu0 0.0
    %615 = vmatpush2.msra.mxu0 0.0
    %616 = vmatprep.subr.mxu0 0.0
    %617 = vmatpush2.msra.mxu0 0.0
    %618 = vmatprep.subr.mxu0 0.0
    %619 = vmatpush2.msra.mxu0 0.0
    %620 = vmatprep.subr.mxu0 0.0
    %621 = vmatpush2.msra.mxu0 0.0
    %622 = vmatprep.mubr.f32.mxu0 0.0
    %623 = vmatmul.mubr.f32.gmra.mxu0 %v213
    %v624 = vpop.f32.mrf.mxu0
    %v625 = vadd.f32 0.0, %v624
    %v626 = vpop.f32.mrf.mxu0
    %627 = vdwg.mxu0
    %v628 = vmul.f32 %v550, %v550
    %v629 = vmul.f32 %v555, %v555
    %630 = vmatprep.subr.mxu0 0.0
    %631 = vmatpush1.msra.mxu0 0.0
    %632 = vmatprep.subr.mxu0 0.0
    %633 = vmatpush1.msra.mxu0 0.0
    %634 = vmatprep.subr.mxu0 0.0
    %635 = vmatpush1.msra.mxu0 0.0
    %636 = vmatprep.subr.mxu0 0.0
    %637 = vmatpush1.msra.mxu0 0.0
    %638 = vmatprep.subr.mxu0 0.0
    %639 = vmatpush1.msra.mxu0 0.0
    %640 = vmatprep.subr.mxu0 0.0
    %641 = vmatpush1.msra.mxu0 0.0
    %642 = vmatprep.subr.mxu0 0.0
    %643 = vmatpush1.msra.mxu0 0.0
    %644 = vmatprep.subr.mxu0 0.0
    %645 = vmatpush1.msra.mxu0 0.0
    %646 = vmatprep.subr.mxu0 0.0
    %647 = vmatpush1.msra.mxu0 0.0
    %648 = vmatprep.subr.mxu0 0.0
    %649 = vmatpush1.msra.mxu0 0.0
    %650 = vmatprep.subr.mxu0 0.0
    %651 = vmatpush1.msra.mxu0 0.0
    %652 = vmatprep.subr.mxu0 0.0
    %653 = vmatpush1.msra.mxu0 0.0
    %654 = vmatprep.subr.mxu0 0.0
    %655 = vmatpush1.msra.mxu0 0.0
    %656 = vmatprep.subr.mxu0 0.0
    %657 = vmatpush1.msra.mxu0 0.0
    %658 = vmatprep.subr.mxu0 0.0
    %659 = vmatpush1.msra.mxu0 %v629
    %660 = vmatprep.subr.mxu0 0.0
    %661 = vmatpush1.msra.mxu0 %v628
    %662 = vmatprep.subr.mxu0 0.0
    %663 = vmatpush2.msra.mxu0 0.0
    %664 = vmatprep.subr.mxu0 0.0
    %665 = vmatpush2.msra.mxu0 0.0
    %666 = vmatprep.subr.mxu0 0.0
    %667 = vmatpush2.msra.mxu0 0.0
    %668 = vmatprep.subr.mxu0 0.0
    %669 = vmatpush2.msra.mxu0 0.0
    %670 = vmatprep.subr.mxu0 0.0
    %671 = vmatpush2.msra.mxu0 0.0
    %672 = vmatprep.subr.mxu0 0.0
    %673 = vmatpush2.msra.mxu0 0.0
    %674 = vmatprep.subr.mxu0 0.0
    %675 = vmatpush2.msra.mxu0 0.0
    %676 = vmatprep.subr.mxu0 0.0
    %677 = vmatpush2.msra.mxu0 0.0
    %678 = vmatprep.subr.mxu0 0.0
    %679 = vmatpush2.msra.mxu0 0.0
    %680 = vmatprep.subr.mxu0 0.0
    %681 = vmatpush2.msra.mxu0 0.0
    %682 = vmatprep.subr.mxu0 0.0
    %683 = vmatpush2.msra.mxu0 0.0
    %684 = vmatprep.subr.mxu0 0.0
    %685 = vmatpush2.msra.mxu0 0.0
    %686 = vmatprep.subr.mxu0 0.0
    %687 = vmatpush2.msra.mxu0 0.0
    %688 = vmatprep.subr.mxu0 0.0
    %689 = vmatpush2.msra.mxu0 0.0
    %690 = vmatprep.subr.mxu0 0.0
    %691 = vmatpush2.msra.mxu0 0.0
    %692 = vmatprep.subr.mxu0 0.0
    %693 = vmatpush2.msra.mxu0 0.0
    %694 = vmatprep.mubr.f32.mxu0 0.0
    %695 = vmatmul.mubr.f32.gmra.mxu0 %v213
    %v696 = vpop.f32.mrf.mxu0
    %v697 = vadd.f32 0.0, %v696
    %v698 = vpop.f32.mrf.mxu0
    %699 = vdwg.mxu0
    %v700 = vmul.f32 %v625, 0.125
    %v701 = vmul.f32 %v697, 0.125
    %v702 = vmul.f32 %v700, %v700
    %v703 = vsub.f32 %v701, %v702
    %v704 = vmax.f32 %v703, 0.0
    %v705 = vadd.f32 %v704, 1e-05
    %v706 = vrsqrt.pop %v705
    %v707 = vmul.f32 %v449, %v706
    %v708 = vmul.f32 %v700, %v707
    %v709 = vsub.f32 %v450, %v708
    %v711 = vlaneseq
    %v712 = vshrl.u32 %v711, 7
    %v713 = vsub.s32 0, %v712
    %v714 = vrot.slane %v707, %v713
    %v716 = vmul.f32 %v550, %v714
    %v717 = vmul.f32 %v555, %v714
    %v719 = vlaneseq
    %v720 = vshrl.u32 %v719, 7
    %v721 = vsub.s32 0, %v720
    %v722 = vrot.slane %v709, %v721
    %v724 = vadd.f32 %v716, %v722
    %v725 = vadd.f32 %v717, %v722
    %v726 = vmax.f32 %v724, 0.0
    %v727 = vmax.f32 %v725, 0.0
    %v728 = vld [vmem:[%s8] sm:$0x1]
    %v729 = vld [vmem:[%s9] sm:$0x1]
    %v730 = vld [vmem:[#allocation8] sm:$0xff]
    %v731 = vld [vmem:[#allocation8 + $0x8] sm:$0xff]
    %v732 = vld [vmem:[#allocation8 + $0x10] sm:$0xff]
    %v733 = vld [vmem:[#allocation8 + $0x18] sm:$0xff]
    %v734 = vld [vmem:[#allocation8 + $0x20] sm:$0xff]
    %v735 = vld [vmem:[#allocation8 + $0x28] sm:$0xff]
    %v736 = vld [vmem:[#allocation8 + $0x30] sm:$0xff]
    %v737 = vld [vmem:[#allocation8 + $0x38] sm:$0xff]
    %v738 = vld [vmem:[#allocation8 + $0x40] sm:$0xff]
    %v739 = vld [vmem:[#allocation8 + $0x48] sm:$0xff]
    %v740 = vld [vmem:[#allocation8 + $0x50] sm:$0xff]
    %v741 = vld [vmem:[#allocation8 + $0x58] sm:$0xff]
    %v742 = vld [vmem:[#allocation8 + $0x60] sm:$0xff]
    %v743 = vld [vmem:[#allocation8 + $0x68] sm:$0xff]
    %v744 = vld [vmem:[#allocation8 + $0x70] sm:$0xff]
    %v745 = vld [vmem:[#allocation8 + $0x78] sm:$0xff]
    %746 = vmatprep.subr.mxu0 0.0
    %747 = vmatpush1.msra.mxu0 %v745
    %748 = vmatprep.subr.mxu0 0.0
    %749 = vmatpush1.msra.mxu0 %v744
    %750 = vmatprep.subr.mxu0 0.0
    %751 = vmatpush1.msra.mxu0 %v743
    %752 = vmatprep.subr.mxu0 0.0
    %753 = vmatpush1.msra.mxu0 %v742
    %754 = vmatprep.subr.mxu0 0.0
    %755 = vmatpush1.msra.mxu0 %v741
    %756 = vmatprep.subr.mxu0 0.0
    %757 = vmatpush1.msra.mxu0 %v740
    %758 = vmatprep.subr.mxu0 0.0
    %759 = vmatpush1.msra.mxu0 %v739
    %760 = vmatprep.subr.mxu0 0.0
    %761 = vmatpush1.msra.mxu0 %v738
    %762 = vmatprep.subr.mxu0 0.0
    %763 = vmatpush1.msra.mxu0 %v737
    %764 = vmatprep.subr.mxu0 0.0
    %765 = vmatpush1.msra.mxu0 %v736
    %766 = vmatprep.subr.mxu0 0.0
    %767 = vmatpush1.msra.mxu0 %v735
    %768 = vmatprep.subr.mxu0 0.0
    %769 = vmatpush1.msra.mxu0 %v734
    %770 = vmatprep.subr.mxu0 0.0
    %771 = vmatpush1.msra.mxu0 %v733
    %772 = vmatprep.subr.mxu0 0.0
    %773 = vmatpush1.msra.mxu0 %v732
    %774 = vmatprep.subr.mxu0 0.0
    %775 = vmatpush1.msra.mxu0 %v731
    %776 = vmatprep.subr.mxu0 0.0
    %777 = vmatpush1.msra.mxu0 %v730
    %778 = vmatprep.subr.mxu0 0.0
    %779 = vmatpush2.msra.mxu0 0.0
    %780 = vmatprep.subr.mxu0 0.0
    %781 = vmatpush2.msra.mxu0 0.0
    %782 = vmatprep.subr.mxu0 0.0
    %783 = vmatpush2.msra.mxu0 0.0
    %784 = vmatprep.subr.mxu0 0.0
    %785 = vmatpush2.msra.mxu0 0.0
    %786 = vmatprep.subr.mxu0 0.0
    %787 = vmatpush2.msra.mxu0 0.0
    %788 = vmatprep.subr.mxu0 0.0
    %789 = vmatpush2.msra.mxu0 0.0
    %790 = vmatprep.subr.mxu0 0.0
    %791 = vmatpush2.msra.mxu0 0.0
    %792 = vmatprep.subr.mxu0 0.0
    %793 = vmatpush2.msra.mxu0 0.0
    %794 = vmatprep.subr.mxu0 0.0
    %795 = vmatpush2.msra.mxu0 0.0
    %796 = vmatprep.subr.mxu0 0.0
    %797 = vmatpush2.msra.mxu0 0.0
    %798 = vmatprep.subr.mxu0 0.0
    %799 = vmatpush2.msra.mxu0 0.0
    %800 = vmatprep.subr.mxu0 0.0
    %801 = vmatpush2.msra.mxu0 0.0
    %802 = vmatprep.subr.mxu0 0.0
    %803 = vmatpush2.msra.mxu0 0.0
    %804 = vmatprep.subr.mxu0 0.0
    %805 = vmatpush2.msra.mxu0 0.0
    %806 = vmatprep.subr.mxu0 0.0
    %807 = vmatpush2.msra.mxu0 0.0
    %808 = vmatprep.subr.mxu0 0.0
    %809 = vmatpush2.msra.mxu0 0.0
    %810 = vmatprep.mubr.f32.mxu0 0.0
    %811 = vmatmul.mubr.f32.gmra.mxu0 %v726
    %v812 = vpop.f32.mrf.mxu0
    %v813 = vadd.f32 0.0, %v812
    %v814 = vpop.f32.mrf.mxu0
    %815 = vmatprep.mubr.f32.mxu0 0.0
    %816 = vmatmul.mubr.f32.gmra.mxu0 %v727
    %v817 = vpop.f32.mrf.mxu0
    %v818 = vadd.f32 0.0, %v817
    %v819 = vpop.f32.mrf.mxu0
    %820 = vdwg.mxu0
    %821 = vmatprep.subr.mxu0 0.0
    %822 = vmatpush1.msra.mxu0 0.0
    %823 = vmatprep.subr.mxu0 0.0
    %824 = vmatpush1.msra.mxu0 0.0
    %825 = vmatprep.subr.mxu0 0.0
    %826 = vmatpush1.msra.mxu0 0.0
    %827 = vmatprep.subr.mxu0 0.0
    %828 = vmatpush1.msra.mxu0 0.0
    %829 = vmatprep.subr.mxu0 0.0
    %830 = vmatpush1.msra.mxu0 0.0
    %831 = vmatprep.subr.mxu0 0.0
    %832 = vmatpush1.msra.mxu0 0.0
    %833 = vmatprep.subr.mxu0 0.0
    %834 = vmatpush1.msra.mxu0 0.0
    %835 = vmatprep.subr.mxu0 0.0
    %836 = vmatpush1.msra.mxu0 0.0
    %837 = vmatprep.subr.mxu0 0.0
    %838 = vmatpush1.msra.mxu0 0.0
    %839 = vmatprep.subr.mxu0 0.0
    %840 = vmatpush1.msra.mxu0 0.0
    %841 = vmatprep.subr.mxu0 0.0
    %842 = vmatpush1.msra.mxu0 0.0
    %843 = vmatprep.subr.mxu0 0.0
    %844 = vmatpush1.msra.mxu0 0.0
    %845 = vmatprep.subr.mxu0 0.0
    %846 = vmatpush1.msra.mxu0 0.0
    %847 = vmatprep.subr.mxu0 0.0
    %848 = vmatpush1.msra.mxu0 0.0
    %849 = vmatprep.subr.mxu0 0.0
    %850 = vmatpush1.msra.mxu0 %v818
    %851 = vmatprep.subr.mxu0 0.0
    %852 = vmatpush1.msra.mxu0 %v813
    %853 = vmatprep.subr.mxu0 0.0
    %854 = vmatpush2.msra.mxu0 0.0
    %855 = vmatprep.subr.mxu0 0.0
    %856 = vmatpush2.msra.mxu0 0.0
    %857 = vmatprep.subr.mxu0 0.0
    %858 = vmatpush2.msra.mxu0 0.0
    %859 = vmatprep.subr.mxu0 0.0
    %860 = vmatpush2.msra.mxu0 0.0
    %861 = vmatprep.subr.mxu0 0.0
    %862 = vmatpush2.msra.mxu0 0.0
    %863 = vmatprep.subr.mxu0 0.0
    %864 = vmatpush2.msra.mxu0 0.0
    %865 = vmatprep.subr.mxu0 0.0
    %866 = vmatpush2.msra.mxu0 0.0
    %867 = vmatprep.subr.mxu0 0.0
    %868 = vmatpush2.msra.mxu0 0.0
    %869 = vmatprep.subr.mxu0 0.0
    %870 = vmatpush2.msra.mxu0 0.0
    %871 = vmatprep.subr.mxu0 0.0
    %872 = vmatpush2.msra.mxu0 0.0
    %873 = vmatprep.subr.mxu0 0.0
    %874 = vmatpush2.msra.mxu0 0.0
    %875 = vmatprep.subr.mxu0 0.0
    %876 = vmatpush2.msra.mxu0 0.0
    %877 = vmatprep.subr.mxu0 0.0
    %878 = vmatpush2.msra.mxu0 0.0
    %879 = vmatprep.subr.mxu0 0.0
    %880 = vmatpush2.msra.mxu0 0.0
    %881 = vmatprep.subr.mxu0 0.0
    %882 = vmatpush2.msra.mxu0 0.0
    %883 = vmatprep.subr.mxu0 0.0
    %884 = vmatpush2.msra.mxu0 0.0
    %885 = vmatprep.mubr.f32.mxu0 0.0
    %886 = vmatmul.mubr.f32.gmra.mxu0 %v213
    %v887 = vpop.f32.mrf.mxu0
    %v888 = vadd.f32 0.0, %v887
    %v889 = vpop.f32.mrf.mxu0
    %890 = vdwg.mxu0
    %v891 = vmul.f32 %v813, %v813
    %v892 = vmul.f32 %v818, %v818
    %893 = vmatprep.subr.mxu0 0.0
    %894 = vmatpush1.msra.mxu0 0.0
    %895 = vmatprep.subr.mxu0 0.0
    %896 = vmatpush1.msra.mxu0 0.0
    %897 = vmatprep.subr.mxu0 0.0
    %898 = vmatpush1.msra.mxu0 0.0
    %899 = vmatprep.subr.mxu0 0.0
    %900 = vmatpush1.msra.mxu0 0.0
    %901 = vmatprep.subr.mxu0 0.0
    %902 = vmatpush1.msra.mxu0 0.0
    %903 = vmatprep.subr.mxu0 0.0
    %904 = vmatpush1.msra.mxu0 0.0
    %905 = vmatprep.subr.mxu0 0.0
    %906 = vmatpush1.msra.mxu0 0.0
    %907 = vmatprep.subr.mxu0 0.0
    %908 = vmatpush1.msra.mxu0 0.0
    %909 = vmatprep.subr.mxu0 0.0
    %910 = vmatpush1.msra.mxu0 0.0
    %911 = vmatprep.subr.mxu0 0.0
    %912 = vmatpush1.msra.mxu0 0.0
    %913 = vmatprep.subr.mxu0 0.0
    %914 = vmatpush1.msra.mxu0 0.0
    %915 = vmatprep.subr.mxu0 0.0
    %916 = vmatpush1.msra.mxu0 0.0
    %917 = vmatprep.subr.mxu0 0.0
    %918 = vmatpush1.msra.mxu0 0.0
    %919 = vmatprep.subr.mxu0 0.0
    %920 = vmatpush1.msra.mxu0 0.0
    %921 = vmatprep.subr.mxu0 0.0
    %922 = vmatpush1.msra.mxu0 %v892
    %923 = vmatprep.subr.mxu0 0.0
    %924 = vmatpush1.msra.mxu0 %v891
    %925 = vmatprep.subr.mxu0 0.0
    %926 = vmatpush2.msra.mxu0 0.0
    %927 = vmatprep.subr.mxu0 0.0
    %928 = vmatpush2.msra.mxu0 0.0
    %929 = vmatprep.subr.mxu0 0.0
    %930 = vmatpush2.msra.mxu0 0.0
    %931 = vmatprep.subr.mxu0 0.0
    %932 = vmatpush2.msra.mxu0 0.0
    %933 = vmatprep.subr.mxu0 0.0
    %934 = vmatpush2.msra.mxu0 0.0
    %935 = vmatprep.subr.mxu0 0.0
    %936 = vmatpush2.msra.mxu0 0.0
    %937 = vmatprep.subr.mxu0 0.0
    %938 = vmatpush2.msra.mxu0 0.0
    %939 = vmatprep.subr.mxu0 0.0
    %940 = vmatpush2.msra.mxu0 0.0
    %941 = vmatprep.subr.mxu0 0.0
    %942 = vmatpush2.msra.mxu0 0.0
    %943 = vmatprep.subr.mxu0 0.0
    %944 = vmatpush2.msra.mxu0 0.0
    %945 = vmatprep.subr.mxu0 0.0
    %946 = vmatpush2.msra.mxu0 0.0
    %947 = vmatprep.subr.mxu0 0.0
    %948 = vmatpush2.msra.mxu0 0.0
    %949 = vmatprep.subr.mxu0 0.0
    %950 = vmatpush2.msra.mxu0 0.0
    %951 = vmatprep.subr.mxu0 0.0
    %952 = vmatpush2.msra.mxu0 0.0
    %953 = vmatprep.subr.mxu0 0.0
    %954 = vmatpush2.msra.mxu0 0.0
    %955 = vmatprep.subr.mxu0 0.0
    %956 = vmatpush2.msra.mxu0 0.0
    %957 = vmatprep.mubr.f32.mxu0 0.0
    %958 = vmatmul.mubr.f32.gmra.mxu0 %v213
    %v959 = vpop.f32.mrf.mxu0
    %v960 = vadd.f32 0.0, %v959
    %v961 = vpop.f32.mrf.mxu0
    %962 = vdwg.mxu0
    %v963 = vmul.f32 %v888, 0.125
    %v964 = vmul.f32 %v960, 0.125
    %v965 = vmul.f32 %v963, %v963
    %v966 = vsub.f32 %v964, %v965
    %v967 = vmax.f32 %v966, 0.0
    %v968 = vadd.f32 %v967, 1e-05
    %v969 = vrsqrt.pop %v968
    %v970 = vmul.f32 %v728, %v969
    %v971 = vmul.f32 %v963, %v970
    %v972 = vsub.f32 %v729, %v971
    %v974 = vlaneseq
    %v975 = vshrl.u32 %v974, 7
    %v976 = vsub.s32 0, %v975
    %v977 = vrot.slane %v970, %v976
    %v979 = vmul.f32 %v813, %v977
    %v980 = vmul.f32 %v818, %v977
    %v982 = vlaneseq
    %v983 = vshrl.u32 %v982, 7
    %v984 = vsub.s32 0, %v983
    %v985 = vrot.slane %v972, %v984
    %v987 = vadd.f32 %v979, %v985
    %v988 = vadd.f32 %v980, %v985
    %v989 = vmax.f32 %v987, 0.0
    %v990 = vmax.f32 %v988, 0.0
    %v991 = vld [vmem:[#allocation10] sm:$0xff]
    %v992 = vld [vmem:[#allocation10 + $0x8] sm:$0xff]
    %v993 = vld [vmem:[#allocation10 + $0x10] sm:$0xff]
    %v994 = vld [vmem:[#allocation10 + $0x18] sm:$0xff]
    %v995 = vld [vmem:[#allocation10 + $0x20] sm:$0xff]
    %v996 = vld [vmem:[#allocation10 + $0x28] sm:$0xff]
    %v997 = vld [vmem:[#allocation10 + $0x30] sm:$0xff]
    %v998 = vld [vmem:[#allocation10 + $0x38] sm:$0xff]
    %v999 = vld [vmem:[#allocation10 + $0x40] sm:$0xff]
    %v1000 = vld [vmem:[#allocation10 + $0x48] sm:$0xff]
    %v1001 = vld [vmem:[#allocation10 + $0x50] sm:$0xff]
    %v1002 = vld [vmem:[#allocation10 + $0x58] sm:$0xff]
    %v1003 = vld [vmem:[#allocation10 + $0x60] sm:$0xff]
    %v1004 = vld [vmem:[#allocation10 + $0x68] sm:$0xff]
    %v1005 = vld [vmem:[#allocation10 + $0x70] sm:$0xff]
    %v1006 = vld [vmem:[#allocation10 + $0x78] sm:$0xff]
    %v1007 = vld [vmem:[%s11] sm:$0x1]
    %v1009 = vlaneseq
    %v1010 = vshrl.u32 %v1009, 7
    %v1011 = vsub.s32 0, %v1010
    %v1012 = vrot.slane %v1007, %v1011
    %1014 = vmatprep.subr.mxu0 0.0
    %1015 = vmatpush1.msra.mxu0 %v1006
    %1016 = vmatprep.subr.mxu0 0.0
    %1017 = vmatpush1.msra.mxu0 %v1005
    %1018 = vmatprep.subr.mxu0 0.0
    %1019 = vmatpush1.msra.mxu0 %v1004
    %1020 = vmatprep.subr.mxu0 0.0
    %1021 = vmatpush1.msra.mxu0 %v1003
    %1022 = vmatprep.subr.mxu0 0.0
    %1023 = vmatpush1.msra.mxu0 %v1002
    %1024 = vmatprep.subr.mxu0 0.0
    %1025 = vmatpush1.msra.mxu0 %v1001
    %1026 = vmatprep.subr.mxu0 0.0
    %1027 = vmatpush1.msra.mxu0 %v1000
    %1028 = vmatprep.subr.mxu0 0.0
    %1029 = vmatpush1.msra.mxu0 %v999
    %1030 = vmatprep.subr.mxu0 0.0
    %1031 = vmatpush1.msra.mxu0 %v998
    %1032 = vmatprep.subr.mxu0 0.0
    %1033 = vmatpush1.msra.mxu0 %v997
    %1034 = vmatprep.subr.mxu0 0.0
    %1035 = vmatpush1.msra.mxu0 %v996
    %1036 = vmatprep.subr.mxu0 0.0
    %1037 = vmatpush1.msra.mxu0 %v995
    %1038 = vmatprep.subr.mxu0 0.0
    %1039 = vmatpush1.msra.mxu0 %v994
    %1040 = vmatprep.subr.mxu0 0.0
    %1041 = vmatpush1.msra.mxu0 %v993
    %1042 = vmatprep.subr.mxu0 0.0
    %1043 = vmatpush1.msra.mxu0 %v992
    %1044 = vmatprep.subr.mxu0 0.0
    %1045 = vmatpush1.msra.mxu0 %v991
    %1046 = vmatprep.subr.mxu0 0.0
    %1047 = vmatpush2.msra.mxu0 0.0
    %1048 = vmatprep.subr.mxu0 0.0
    %1049 = vmatpush2.msra.mxu0 0.0
    %1050 = vmatprep.subr.mxu0 0.0
    %1051 = vmatpush2.msra.mxu0 0.0
    %1052 = vmatprep.subr.mxu0 0.0
    %1053 = vmatpush2.msra.mxu0 0.0
    %1054 = vmatprep.subr.mxu0 0.0
    %1055 = vmatpush2.msra.mxu0 0.0
    %1056 = vmatprep.subr.mxu0 0.0
    %1057 = vmatpush2.msra.mxu0 0.0
    %1058 = vmatprep.subr.mxu0 0.0
    %1059 = vmatpush2.msra.mxu0 0.0
    %1060 = vmatprep.subr.mxu0 0.0
    %1061 = vmatpush2.msra.mxu0 0.0
    %1062 = vmatprep.subr.mxu0 0.0
    %1063 = vmatpush2.msra.mxu0 0.0
    %1064 = vmatprep.subr.mxu0 0.0
    %1065 = vmatpush2.msra.mxu0 0.0
    %1066 = vmatprep.subr.mxu0 0.0
    %1067 = vmatpush2.msra.mxu0 0.0
    %1068 = vmatprep.subr.mxu0 0.0
    %1069 = vmatpush2.msra.mxu0 0.0
    %1070 = vmatprep.subr.mxu0 0.0
    %1071 = vmatpush2.msra.mxu0 0.0
    %1072 = vmatprep.subr.mxu0 0.0
    %1073 = vmatpush2.msra.mxu0 0.0
    %1074 = vmatprep.subr.mxu0 0.0
    %1075 = vmatpush2.msra.mxu0 0.0
    %1076 = vmatprep.subr.mxu0 0.0
    %1077 = vmatpush2.msra.mxu0 0.0
    %1078 = vmatprep.mubr.f32.mxu0 0.0
    %1079 = vmatmul.mubr.f32.gmra.mxu0 %v989
    %v1080 = vpop.f32.mrf.mxu0
    %v1081 = vadd.f32 %v1012, %v1080
    %v1082 = vpop.f32.mrf.mxu0
    %1083 = vmatprep.mubr.f32.mxu0 0.0
    %1084 = vmatmul.mubr.f32.gmra.mxu0 %v990
    %v1085 = vpop.f32.mrf.mxu0
    %v1086 = vadd.f32 %v1012, %v1085
    %v1087 = vpop.f32.mrf.mxu0
    %1088 = vdwg.mxu0
    %1089 = vst [vmem:[#allocation11] sm:$0xff] %v1081
    %1090 = vst [vmem:[#allocation11 + $0x8] sm:$0xff] %v1086
    // Predicated region
    $region70: #{tpu_custom_call.1} parent=1 // pred_check
      _
    $region71: #{tpu_custom_call.1} parent=1 // pred_check_branch
      %1092 = sbr.rel (0) target = $region73
    $region72: #{tpu_custom_call.1} parent=1 // pred_region
      %s1094 = ssub.s32 256, 256
      %1095 = vsyncadd [#allocation4], %s1094
      %s1096 = sshll.u32 [#allocation11], 4
      %s1097 = int_to_ptr.vmem [resolvable:$true] %s1096
      %1102 = dma.vmem_to_hbm [thread:$0]  %s1097, 256, %s12, [#allocation4], 128, 128, 8
    $region73: #{tpu_custom_call.1} parent=1 // pred_fallthru
      _
    // Predicated region
    $region74: #{tpu_custom_call.1} parent=1 // pred_check
      _
    $region75: #{tpu_custom_call.1} parent=1 // pred_check_branch
      %1104 = sbr.rel (0) target = $region77
    $region76: #{tpu_custom_call.1} parent=1 // pred_region
      %1105 = dma.done [#allocation4], 256
    $region77: #{tpu_custom_call.1} parent=1 // pred_fallthru
      _
    %1106 = vsyncpa [#allocation3], 1
    %1107 = vsyncpa [#allocation6], 1
    %1108 = vsyncpa [#allocation9], 1
    %1109 = vsyncpa [#allocation4], 1

</llo_original>
